<compile_context>
chip_gen: v7x
topology: tpu7x:2x2x1
jax: 0.10.0
libtpu: 0.0.40
codegen_flags: <defaults>
</compile_context>

<pallas_src>
import functools

import jax
import jax.numpy as jnp
from jax import lax
from jax.experimental import pallas as pl
from jax.experimental.pallas import tpu as pltpu

INPUT_DIM = 128
HIDDEN = 128
NUM_CLASSES = 11
PADDED_CLASSES = 16          # narrow padded classifier width (>= NUM_CLASSES)
BN_EPS = 1e-5
LEAKY_SLOPE = 0.1


def shadow_top_kernel(x_ref, w1_ref, b1_ref, w2_ref, b2_ref, o_ref):
    # Cast x to the matmul dtype in-kernel (VPU, hidden under the DMA pipeline)
    # instead of a separate wrapper-side XLA pass over HBM.
    x = x_ref[...].astype(w1_ref.dtype)

    # Linear1 with BatchNorm pre-folded into (w1, b1). MXU, f32 accumulate.
    h = jnp.dot(x, w1_ref[...], preferred_element_type=jnp.float32)
    h = h + b1_ref[...]                               # (TB,128) + (1,128), f32

    # LeakyReLU(0.1) in f32 on the VPU.
    h = jnp.where(h >= 0, h, LEAKY_SLOPE * h)

    # Dropout(0.2): identity at inference.
    # TODO(synk): training-mode dropout (stateful PRNG mask) not implemented.

    # Linear2 (classifier padded to 16 lanes -> 8x smaller logits writeback).
    out = jnp.dot(h.astype(w2_ref.dtype), w2_ref[...],
                  preferred_element_type=jnp.float32)
    o_ref[...] = (out + b2_ref[...]).astype(o_ref.dtype)


@functools.partial(jax.jit, static_argnames=("tile_b", "matmul_dtype"))
def shadow_top_forward(x, params, *, tile_b=4096, matmul_dtype=jnp.bfloat16):
    """x: (B, INPUT_DIM) float32 or bfloat16. Returns (B, NUM_CLASSES) f32."""
    B = x.shape[0]

    # ---- Host-side (traced, one-time per call) parameter transforms --------
    # Fold BatchNorm into Linear1 (identical eval-mode numerics).
    scale = params["gamma"] * lax.rsqrt(params["running_var"] + BN_EPS)   # (1, H)
    w1f = (params["w1"] * scale).astype(matmul_dtype)                     # (IN, H)
    b1f = (params["b1"] - params["running_mean"]) * scale + params["beta"]  # f32

    # Pad classifier to a narrow 16-wide output (zero columns -> logits unaffected).
    w2p = jnp.zeros((HIDDEN, PADDED_CLASSES), matmul_dtype).at[:, :NUM_CLASSES].set(
        params["w2"].astype(matmul_dtype))
    b2p = jnp.zeros((1, PADDED_CLASSES), jnp.float32).at[:, :NUM_CLASSES].set(params["b2"])

    # ---- Batch tiling (no host-side pad; Pallas masks the partial block) ---
    TB = max(8, min((tile_b // 8) * 8, 16384))     # cap keeps working set << v7x VMEM
    if B <= TB:
        if B >= 2048:
            # Split a large single-tile batch in two so the "parallel" grid
            # axis feeds both v7x TensorCores (no effect on v5e/v6e).
            TB = (((B + 1) // 2) + 7) // 8 * 8
        else:
            TB = max(8, ((B + 7) // 8) * 8)        # one sublane-aligned tile
    grid = (pl.cdiv(B, TB),)

    # Scoped-VMEM limit: double-buffered x/out tiles + resident weights, with
    # headroom; explicit so large tiles also pass v5e's 16 MiB default.
    x_bpe = jnp.dtype(x.dtype).itemsize
    w_bpe = jnp.dtype(matmul_dtype).itemsize
    vmem_bytes = (2 * TB * (INPUT_DIM * x_bpe + PADDED_CLASSES * 4)
                  + 2 * (INPUT_DIM * HIDDEN + HIDDEN * PADDED_CLASSES) * w_bpe
                  + 2 * (HIDDEN + PADDED_CLASSES) * 4)
    vmem_limit = int(min(max(vmem_bytes + (4 << 20), 16 << 20), 32 << 20))

    cost = pl.CostEstimate(
        flops=2 * B * (INPUT_DIM * HIDDEN + HIDDEN * PADDED_CLASSES),
        transcendentals=0,
        bytes_accessed=(B * INPUT_DIM * x_bpe                       # stream x
                        + B * PADDED_CLASSES * 4                    # narrow logits write
                        + (INPUT_DIM * HIDDEN + HIDDEN * PADDED_CLASSES) * w_bpe
                        + (HIDDEN + PADDED_CLASSES) * 4),
    )

    out_padded = pl.pallas_call(
        shadow_top_kernel,
        out_shape=jax.ShapeDtypeStruct((B, PADDED_CLASSES), jnp.float32),
        grid=grid,
        in_specs=[
            pl.BlockSpec((TB, INPUT_DIM), lambda i: (i, 0)),            # x tile streams
            pl.BlockSpec((INPUT_DIM, HIDDEN), lambda i: (0, 0)),        # weights resident
            pl.BlockSpec((1, HIDDEN), lambda i: (0, 0)),
            pl.BlockSpec((HIDDEN, PADDED_CLASSES), lambda i: (0, 0)),
            pl.BlockSpec((1, PADDED_CLASSES), lambda i: (0, 0)),
        ],
        out_specs=pl.BlockSpec((TB, PADDED_CLASSES), lambda i: (i, 0)),
        compiler_params=pltpu.CompilerParams(
            dimension_semantics=("parallel",),
            vmem_limit_bytes=vmem_limit,
        ),
        cost_estimate=cost,
    )(x, w1f, b1f, w2p, b2p)

    # Slice (masked) padded rows/classes back to the module's output shape.
    return out_padded[:B, :NUM_CLASSES]


def init_params(key):
    """Deterministic synthetic parameters matching the PyTorch module's shapes."""
    ks = jax.random.split(key, 8)
    # Linear1: PyTorch weight is (out,in); stored transposed (in,out) for x @ W.
    w1 = jax.random.normal(ks[0], (INPUT_DIM, HIDDEN), jnp.float32) * 0.05
    b1 = jax.random.normal(ks[1], (1, HIDDEN), jnp.float32) * 0.05
    # BatchNorm1d(128) affine + running stats (eval mode).
    gamma = 1.0 + 0.1 * jax.random.normal(ks[2], (1, HIDDEN), jnp.float32)
    beta = 0.1 * jax.random.normal(ks[3], (1, HIDDEN), jnp.float32)
    running_mean = 0.1 * jax.random.normal(ks[4], (1, HIDDEN), jnp.float32)
    running_var = 1.0 + 0.1 * jax.random.uniform(ks[5], (1, HIDDEN), jnp.float32)
    # Linear2: (128 -> 11), transposed to (128, 11).
    w2 = jax.random.normal(ks[6], (HIDDEN, NUM_CLASSES), jnp.float32) * 0.05
    b2 = jax.random.normal(ks[7], (1, NUM_CLASSES), jnp.float32) * 0.05
    return dict(w1=w1, b1=b1, gamma=gamma, beta=beta,
                running_mean=running_mean, running_var=running_var,
                w2=w2, b2=b2)


def reference_forward(x, p):
    """Pure-JAX f32 reference of the PyTorch eval-mode forward."""
    h = x @ p["w1"] + p["b1"]
    h = (h - p["running_mean"]) * lax.rsqrt(p["running_var"] + BN_EPS) * p["gamma"] + p["beta"]
    h = jnp.where(h >= 0, h, LEAKY_SLOPE * h)
    return h @ p["w2"] + p["b2"]


if __name__ == "__main__":
    key = jax.random.PRNGKey(0)
    kx, kx2, kp = jax.random.split(key, 3)
    params = init_params(kp)

    # --- Small-batch check (B=8), f32 matmuls, tight tolerance --------------
    B = 8
    x = jax.random.normal(kx, (B, INPUT_DIM), jnp.float32)
    out = shadow_top_forward(x, params, matmul_dtype=jnp.float32)
    out = jax.block_until_ready(out)
    ref = reference_forward(x, params)
    assert out.shape == (B, NUM_CLASSES), out.shape
    assert jnp.allclose(out, ref, atol=1e-4, rtol=1e-4), float(jnp.max(jnp.abs(out - ref)))

    # --- Tiled check with a partial (masked) last block, bf16 MXU -----------
    B2 = 300
    x2 = jax.random.normal(kx2, (B2, INPUT_DIM), jnp.float32)
    out2 = shadow_top_forward(x2, params, tile_b=256, matmul_dtype=jnp.bfloat16)
    out2 = jax.block_until_ready(out2)
    ref2 = reference_forward(x2, params)
    assert out2.shape == (B2, NUM_CLASSES), out2.shape
    assert jnp.allclose(out2, ref2, atol=2e-2, rtol=2e-2), float(jnp.max(jnp.abs(out2 - ref2)))

    print("KERNEL_OK")
</pallas_src>

<mosaic_0001>
module attributes {stable_mosaic.version = 11 : i64} {
  func.func @shadow_top_kernel(%arg0: i32, %arg1: memref<8x128xf32, #tpu.memory_space<vmem>>, %arg2: memref<128x128xf32, #tpu.memory_space<vmem>>, %arg3: memref<1x128xf32, #tpu.memory_space<vmem>>, %arg4: memref<128x16xf32, #tpu.memory_space<vmem>>, %arg5: memref<1x16xf32, #tpu.memory_space<vmem>>, %arg6: memref<8x16xf32, #tpu.memory_space<vmem>>) attributes {dimension_semantics = [#tpu.dimension_semantics<parallel>], iteration_bounds = array<i64: 1>, scalar_prefetch = 0 : i64, scratch_operands = 0 : i64, tpu.core_type = #tpu.core_type<tc>, window_params = [{transform_indices = @transform_0, window_bounds = array<i64: 8, 128>}, {pipeline_mode = #tpu.pipeline_mode<synchronous>, transform_indices = @transform_1, window_bounds = array<i64: 128, 128>}, {pipeline_mode = #tpu.pipeline_mode<synchronous>, transform_indices = @transform_2, window_bounds = array<i64: 1, 128>}, {pipeline_mode = #tpu.pipeline_mode<synchronous>, transform_indices = @transform_3, window_bounds = array<i64: 128, 16>}, {pipeline_mode = #tpu.pipeline_mode<synchronous>, transform_indices = @transform_4, window_bounds = array<i64: 1, 16>}, {transform_indices = @transform_5, window_bounds = array<i64: 8, 16>}]} {
    %c0 = arith.constant 0 : index
    %c0_0 = arith.constant 0 : index
    %0 = vector.load %arg1[%c0, %c0_0] : memref<8x128xf32, #tpu.memory_space<vmem>>, vector<8x128xf32>
    %c0_1 = arith.constant 0 : index
    %c0_2 = arith.constant 0 : index
    %1 = vector.load %arg2[%c0_1, %c0_2] : memref<128x128xf32, #tpu.memory_space<vmem>>, vector<128x128xf32>
    %cst = arith.constant dense<0.000000e+00> : vector<8x128xf32>
    %2 = tpu.matmul %0, %1, %cst {dimension_numbers = #tpu.dot_dimension_numbers<[1], [0], [0], [1], [0, 0, 1, 1], [], []>} : vector<8x128xf32>, vector<128x128xf32>, vector<8x128xf32> -> vector<8x128xf32>
    %c0_3 = arith.constant 0 : index
    %c0_4 = arith.constant 0 : index
    %3 = vector.load %arg3[%c0_3, %c0_4] : memref<1x128xf32, #tpu.memory_space<vmem>>, vector<1x128xf32>
    %4 = vector.broadcast %3 : vector<1x128xf32> to vector<8x128xf32>
    %5 = arith.addf %2, %4 : vector<8x128xf32>
    %cst_5 = arith.constant 0.000000e+00 : f32
    %6 = vector.broadcast %cst_5 : f32 to vector<8x128xf32>
    %7 = arith.cmpf oge, %5, %6 : vector<8x128xf32>
    %cst_6 = arith.constant 1.000000e-01 : f32
    %8 = vector.broadcast %cst_6 : f32 to vector<8x128xf32>
    %9 = arith.mulf %8, %5 : vector<8x128xf32>
    %10 = arith.select %7, %5, %9 : vector<8x128xi1>, vector<8x128xf32>
    %c0_7 = arith.constant 0 : index
    %c0_8 = arith.constant 0 : index
    %11 = vector.load %arg4[%c0_7, %c0_8] : memref<128x16xf32, #tpu.memory_space<vmem>>, vector<128x16xf32>
    %cst_9 = arith.constant dense<0.000000e+00> : vector<8x16xf32>
    %12 = tpu.matmul %10, %11, %cst_9 {dimension_numbers = #tpu.dot_dimension_numbers<[1], [0], [0], [1], [0, 0, 1, 1], [], []>} : vector<8x128xf32>, vector<128x16xf32>, vector<8x16xf32> -> vector<8x16xf32>
    %c0_10 = arith.constant 0 : index
    %c0_11 = arith.constant 0 : index
    %13 = vector.load %arg5[%c0_10, %c0_11] : memref<1x16xf32, #tpu.memory_space<vmem>>, vector<1x16xf32>
    %14 = vector.broadcast %13 : vector<1x16xf32> to vector<8x16xf32>
    %15 = arith.addf %12, %14 : vector<8x16xf32>
    %c0_12 = arith.constant 0 : index
    %c0_13 = arith.constant 0 : index
    %16 = vector.load %arg6[%c0_12, %c0_13] : memref<8x16xf32, #tpu.memory_space<vmem>>, vector<8x16xf32>
    tpu.vector_store %arg6[%c0_12, %c0_13], %15 {strides = array<i32>} : memref<8x16xf32, #tpu.memory_space<vmem>>, vector<8x16xf32>,
    return
  }
  func.func @transform_0(%arg0: i32) -> (i32, i32) {
    %c0_i32 = arith.constant 0 : i32
    %c0_i32_0 = arith.constant 0 : i32
    return %arg0, %c0_i32 : i32, i32
  }
  func.func @transform_1(%arg0: i32) -> (i32, i32) {
    %c0_i32 = arith.constant 0 : i32
    %c0_i32_0 = arith.constant 0 : i32
    %c0_i32_1 = arith.constant 0 : i32
    return %c0_i32, %c0_i32_0 : i32, i32
  }
  func.func @transform_2(%arg0: i32) -> (i32, i32) {
    %c0_i32 = arith.constant 0 : i32
    %c0_i32_0 = arith.constant 0 : i32
    %c0_i32_1 = arith.constant 0 : i32
    return %c0_i32, %c0_i32_0 : i32, i32
  }
  func.func @transform_3(%arg0: i32) -> (i32, i32) {
    %c0_i32 = arith.constant 0 : i32
    %c0_i32_0 = arith.constant 0 : i32
    %c0_i32_1 = arith.constant 0 : i32
    return %c0_i32, %c0_i32_0 : i32, i32
  }
  func.func @transform_4(%arg0: i32) -> (i32, i32) {
    %c0_i32 = arith.constant 0 : i32
    %c0_i32_0 = arith.constant 0 : i32
    %c0_i32_1 = arith.constant 0 : i32
    return %c0_i32, %c0_i32_0 : i32, i32
  }
  func.func @transform_5(%arg0: i32) -> (i32, i32) {
    %c0_i32 = arith.constant 0 : i32
    %c0_i32_0 = arith.constant 0 : i32
    return %arg0, %c0_i32 : i32, i32
  }
}

</mosaic_0001>

<llo_original>
// kernel: shadow_top_forward.1
$region0: #{shadow_top_forward.1}
  #allocation0 [shape = 'u32[]', space=smem, size = 0x4, offset = 0x4, fixed_abs, tag = 'smem constant byte address 0x4 - core index']
  #allocation1 [shape = 'u32[144,128]{1,0:T(1,128)}', space=vmem, size = 0x12000, scoped, tag = 'internal scratch']
  %s0 = inlined_call_operand.vmem [shape: f32[8,128], index: 0, kind: input, shape index: {}]
  %s1 = inlined_call_operand.vmem [shape: f32[128,128], index: 1, kind: input, shape index: {}]
  %s2 = inlined_call_operand.vmem [shape: f32[1,128], index: 2, kind: input, shape index: {}]
  %s3 = inlined_call_operand.vmem [shape: f32[128,16], index: 3, kind: input, shape index: {}]
  %s4 = inlined_call_operand.vmem [shape: f32[1,16], index: 4, kind: input, shape index: {}]
  %s5 = inlined_call_operand.hbm [shape: f32[8,16], index: 5, kind: output, shape index: {}]
  %s6 = sld [smem:[#allocation0]]
  $region30: #{shadow_top_forward.1} parent=0
    _
  %s8 = ssub.s32 1, %s6
  %s9 = scalar_select 0, %s8, %s6
  $region1: #{shadow_top_forward.1} parent=0
    #allocation2 [shape = 'u8[4096]{0}', space=vmem, size = 0x1000, scoped, tag = 'output window, operand 0, single buffered']
    #allocation3 [shape = 's32[1]{0}', space=sflag, size = 0x4, scoped, tag = 'scoped memory for shadow_top_forward.1']
    %10 = vsyncpa [#allocation3], 0
    // Predicated region
    $region2: #{shadow_top_forward.1} parent=1 // pred_check
      _
    $region3: #{shadow_top_forward.1} parent=1 // pred_check_branch
      %12 = sbr.rel (0) target = $region5
    $region4: #{shadow_top_forward.1} parent=1 // pred_region
      _
    $region5: #{shadow_top_forward.1} parent=1 // pred_fallthru
      _
    // Predicated region
    $region6: #{shadow_top_forward.1} parent=1 // pred_check
      _
    $region7: #{shadow_top_forward.1} parent=1 // pred_check_branch
      %14 = sbr.rel (0) target = $region9
    $region8: #{shadow_top_forward.1} parent=1 // pred_region
      _
    $region9: #{shadow_top_forward.1} parent=1 // pred_fallthru
      _
    // Predicated region
    $region10: #{shadow_top_forward.1} parent=1 // pred_check
      _
    $region11: #{shadow_top_forward.1} parent=1 // pred_check_branch
      %16 = sbr.rel (0) target = $region13
    $region12: #{shadow_top_forward.1} parent=1 // pred_region
      _
    $region13: #{shadow_top_forward.1} parent=1 // pred_fallthru
      _
    // Predicated region
    $region14: #{shadow_top_forward.1} parent=1 // pred_check
      _
    $region15: #{shadow_top_forward.1} parent=1 // pred_check_branch
      %18 = sbr.rel (0) target = $region17
    $region16: #{shadow_top_forward.1} parent=1 // pred_region
      _
    $region17: #{shadow_top_forward.1} parent=1 // pred_fallthru
      _
    // Predicated region
    $region18: #{shadow_top_forward.1} parent=1 // pred_check
      _
    $region19: #{shadow_top_forward.1} parent=1 // pred_check_branch
      %20 = sbr.rel (0) target = $region21
    $region20: #{shadow_top_forward.1} parent=1 // pred_region
      _
    $region21: #{shadow_top_forward.1} parent=1 // pred_fallthru
      _
    %v21 = vld [vmem:[%s0] sm:$0xff]
    %v22 = vld [vmem:[%s1] sm:$0xff]
    %v23 = vld [vmem:[%s1 + $0x8] sm:$0xff]
    %v24 = vld [vmem:[%s1 + $0x10] sm:$0xff]
    %v25 = vld [vmem:[%s1 + $0x18] sm:$0xff]
    %v26 = vld [vmem:[%s1 + $0x20] sm:$0xff]
    %v27 = vld [vmem:[%s1 + $0x28] sm:$0xff]
    %v28 = vld [vmem:[%s1 + $0x30] sm:$0xff]
    %v29 = vld [vmem:[%s1 + $0x38] sm:$0xff]
    %v30 = vld [vmem:[%s1 + $0x40] sm:$0xff]
    %v31 = vld [vmem:[%s1 + $0x48] sm:$0xff]
    %v32 = vld [vmem:[%s1 + $0x50] sm:$0xff]
    %v33 = vld [vmem:[%s1 + $0x58] sm:$0xff]
    %v34 = vld [vmem:[%s1 + $0x60] sm:$0xff]
    %v35 = vld [vmem:[%s1 + $0x68] sm:$0xff]
    %v36 = vld [vmem:[%s1 + $0x70] sm:$0xff]
    %v37 = vld [vmem:[%s1 + $0x78] sm:$0xff]
    %v38 = vld [vmem:[%s2] sm:$0x1]
    %v40 = vlaneseq
    %v41 = vshrl.u32 %v40, 7
    %v42 = vsub.s32 0, %v41
    %v43 = vrot.slane %v38, %v42
    %45 = vmatprep.subr.mxu0 0.0
    %46 = vmatpush1.msra.mxu0 %v22
    %47 = vmatprep.subr.mxu0 0.0
    %48 = vmatpush1.msra.mxu0 %v23
    %49 = vmatprep.subr.mxu0 0.0
    %50 = vmatpush1.msra.mxu0 %v24
    %51 = vmatprep.subr.mxu0 0.0
    %52 = vmatpush1.msra.mxu0 %v25
    %53 = vmatprep.subr.mxu0 0.0
    %54 = vmatpush1.msra.mxu0 %v26
    %55 = vmatprep.subr.mxu0 0.0
    %56 = vmatpush1.msra.mxu0 %v27
    %57 = vmatprep.subr.mxu0 0.0
    %58 = vmatpush1.msra.mxu0 %v28
    %59 = vmatprep.subr.mxu0 0.0
    %60 = vmatpush1.msra.mxu0 %v29
    %61 = vmatprep.subr.mxu0 0.0
    %62 = vmatpush1.msra.mxu0 %v30
    %63 = vmatprep.subr.mxu0 0.0
    %64 = vmatpush1.msra.mxu0 %v31
    %65 = vmatprep.subr.mxu0 0.0
    %66 = vmatpush1.msra.mxu0 %v32
    %67 = vmatprep.subr.mxu0 0.0
    %68 = vmatpush1.msra.mxu0 %v33
    %69 = vmatprep.subr.mxu0 0.0
    %70 = vmatpush1.msra.mxu0 %v34
    %71 = vmatprep.subr.mxu0 0.0
    %72 = vmatpush1.msra.mxu0 %v35
    %73 = vmatprep.subr.mxu0 0.0
    %74 = vmatpush1.msra.mxu0 %v36
    %75 = vmatprep.subr.mxu0 0.0
    %76 = vmatpush1.msra.mxu0 %v37
    %77 = vmatprep.subr.mxu0 0.0
    %78 = vmatpush1.msra.mxu0 0.0
    %79 = vmatprep.subr.mxu0 0.0
    %80 = vmatpush1.msra.mxu0 0.0
    %81 = vmatprep.subr.mxu0 0.0
    %82 = vmatpush1.msra.mxu0 0.0
    %83 = vmatprep.subr.mxu0 0.0
    %84 = vmatpush1.msra.mxu0 0.0
    %85 = vmatprep.subr.mxu0 0.0
    %86 = vmatpush1.msra.mxu0 0.0
    %87 = vmatprep.subr.mxu0 0.0
    %88 = vmatpush1.msra.mxu0 0.0
    %89 = vmatprep.subr.mxu0 0.0
    %90 = vmatpush1.msra.mxu0 0.0
    %91 = vmatprep.subr.mxu0 0.0
    %92 = vmatpush1.msra.mxu0 0.0
    %93 = vmatprep.subr.mxu0 0.0
    %94 = vmatpush1.msra.mxu0 0.0
    %95 = vmatprep.subr.mxu0 0.0
    %96 = vmatpush1.msra.mxu0 0.0
    %97 = vmatprep.subr.mxu0 0.0
    %98 = vmatpush1.msra.mxu0 0.0
    %99 = vmatprep.subr.mxu0 0.0
    %100 = vmatpush1.msra.mxu0 0.0
    %101 = vmatprep.subr.mxu0 0.0
    %102 = vmatpush1.msra.mxu0 0.0
    %103 = vmatprep.subr.mxu0 0.0
    %104 = vmatpush1.msra.mxu0 0.0
    %105 = vmatprep.subr.mxu0 0.0
    %106 = vmatpush1.msra.mxu0 0.0
    %107 = vmatprep.subr.mxu0 0.0
    %108 = vmatpush1.msra.mxu0 0.0
    %109 = vmatprep.mubr.f32.mxu0 0.0
    %110 = vmatmul.mubr.f32.gmra.mrb[0].mxu0 %v21
    %v111 = vpop.f32.mrb[0].mxu0
    %v112 = vadd.f32 %v43, %v111
    %v113 = vpop.f32.mrb[0].mxu0
    %114 = vdwg.mxu0
    %vm115 = vcmp.ge.f32.partialorder %v112, 0.0
    %v116 = vmul.f32 %v112, 0.1
    %v117 = vsel %vm115, %v112, %v116
    %v118 = vld [vmem:[%s3] sm:$0xff]
    %v119 = vld [vmem:[%s3 + $0x8] sm:$0xff]
    %v120 = vld [vmem:[%s3 + $0x10] sm:$0xff]
    %v121 = vld [vmem:[%s3 + $0x18] sm:$0xff]
    %v122 = vld [vmem:[%s3 + $0x20] sm:$0xff]
    %v123 = vld [vmem:[%s3 + $0x28] sm:$0xff]
    %v124 = vld [vmem:[%s3 + $0x30] sm:$0xff]
    %v125 = vld [vmem:[%s3 + $0x38] sm:$0xff]
    %v126 = vld [vmem:[%s3 + $0x40] sm:$0xff]
    %v127 = vld [vmem:[%s3 + $0x48] sm:$0xff]
    %v128 = vld [vmem:[%s3 + $0x50] sm:$0xff]
    %v129 = vld [vmem:[%s3 + $0x58] sm:$0xff]
    %v130 = vld [vmem:[%s3 + $0x60] sm:$0xff]
    %v131 = vld [vmem:[%s3 + $0x68] sm:$0xff]
    %v132 = vld [vmem:[%s3 + $0x70] sm:$0xff]
    %v133 = vld [vmem:[%s3 + $0x78] sm:$0xff]
    %v134 = vld [vmem:[%s4] sm:$0x1]
    %v136 = vlaneseq
    %v137 = vshrl.u32 %v136, 7
    %v138 = vsub.s32 0, %v137
    %v139 = vrot.slane %v134, %v138
    %141 = vmatprep.subr.mxu0 0.0
    %142 = vmatpush1.msra.mxu0 %v118
    %143 = vmatprep.subr.mxu0 0.0
    %144 = vmatpush1.msra.mxu0 %v119
    %145 = vmatprep.subr.mxu0 0.0
    %146 = vmatpush1.msra.mxu0 %v120
    %147 = vmatprep.subr.mxu0 0.0
    %148 = vmatpush1.msra.mxu0 %v121
    %149 = vmatprep.subr.mxu0 0.0
    %150 = vmatpush1.msra.mxu0 %v122
    %151 = vmatprep.subr.mxu0 0.0
    %152 = vmatpush1.msra.mxu0 %v123
    %153 = vmatprep.subr.mxu0 0.0
    %154 = vmatpush1.msra.mxu0 %v124
    %155 = vmatprep.subr.mxu0 0.0
    %156 = vmatpush1.msra.mxu0 %v125
    %157 = vmatprep.subr.mxu0 0.0
    %158 = vmatpush1.msra.mxu0 %v126
    %159 = vmatprep.subr.mxu0 0.0
    %160 = vmatpush1.msra.mxu0 %v127
    %161 = vmatprep.subr.mxu0 0.0
    %162 = vmatpush1.msra.mxu0 %v128
    %163 = vmatprep.subr.mxu0 0.0
    %164 = vmatpush1.msra.mxu0 %v129
    %165 = vmatprep.subr.mxu0 0.0
    %166 = vmatpush1.msra.mxu0 %v130
    %167 = vmatprep.subr.mxu0 0.0
    %168 = vmatpush1.msra.mxu0 %v131
    %169 = vmatprep.subr.mxu0 0.0
    %170 = vmatpush1.msra.mxu0 %v132
    %171 = vmatprep.subr.mxu0 0.0
    %172 = vmatpush1.msra.mxu0 %v133
    %173 = vmatprep.subr.mxu0 0.0
    %174 = vmatpush1.msra.mxu0 0.0
    %175 = vmatprep.subr.mxu0 0.0
    %176 = vmatpush1.msra.mxu0 0.0
    %177 = vmatprep.subr.mxu0 0.0
    %178 = vmatpush1.msra.mxu0 0.0
    %179 = vmatprep.subr.mxu0 0.0
    %180 = vmatpush1.msra.mxu0 0.0
    %181 = vmatprep.subr.mxu0 0.0
    %182 = vmatpush1.msra.mxu0 0.0
    %183 = vmatprep.subr.mxu0 0.0
    %184 = vmatpush1.msra.mxu0 0.0
    %185 = vmatprep.subr.mxu0 0.0
    %186 = vmatpush1.msra.mxu0 0.0
    %187 = vmatprep.subr.mxu0 0.0
    %188 = vmatpush1.msra.mxu0 0.0
    %189 = vmatprep.subr.mxu0 0.0
    %190 = vmatpush1.msra.mxu0 0.0
    %191 = vmatprep.subr.mxu0 0.0
    %192 = vmatpush1.msra.mxu0 0.0
    %193 = vmatprep.subr.mxu0 0.0
    %194 = vmatpush1.msra.mxu0 0.0
    %195 = vmatprep.subr.mxu0 0.0
    %196 = vmatpush1.msra.mxu0 0.0
    %197 = vmatprep.subr.mxu0 0.0
    %198 = vmatpush1.msra.mxu0 0.0
    %199 = vmatprep.subr.mxu0 0.0
    %200 = vmatpush1.msra.mxu0 0.0
    %201 = vmatprep.subr.mxu0 0.0
    %202 = vmatpush1.msra.mxu0 0.0
    %203 = vmatprep.subr.mxu0 0.0
    %204 = vmatpush1.msra.mxu0 0.0
    %205 = vmatprep.mubr.f32.mxu0 0.0
    %206 = vmatmul.mubr.f32.gmra.mrb[0].mxu0 %v117
    %v207 = vpop.f32.mrb[0].mxu0
    %v208 = vadd.f32 %v139, %v207
    %v209 = vpop.f32.mrb[0].mxu0
    %210 = vdwg.mxu0
    %vm211 = vcmask 130048
    %212 = vst.msk [vmem:[#allocation2] sm:$0xff] %vm211, %v208
    // Predicated region
    $region22: #{shadow_top_forward.1} parent=1 // pred_check
      _
    $region23: #{shadow_top_forward.1} parent=1 // pred_check_branch
      %214 = sbr.rel (0) target = $region25
    $region24: #{shadow_top_forward.1} parent=1 // pred_region
      %s216 = ssub.s32 128, 128
      %217 = vsyncadd [#allocation3], %s216
      %s219 = sshll.u32 [#allocation2], 4
      %s220 = int_to_ptr.vmem [resolvable:$true] %s219
      %222 = dma.vmem_to_hbm [thread:$0]  %s220, 128, %s5, [#allocation3]
    $region25: #{shadow_top_forward.1} parent=1 // pred_fallthru
      _
    // Predicated region
    $region26: #{shadow_top_forward.1} parent=1 // pred_check
      _
    $region27: #{shadow_top_forward.1} parent=1 // pred_check_branch
      %224 = sbr.rel (0) target = $region29
    $region28: #{shadow_top_forward.1} parent=1 // pred_region
      %225 = dma.done [#allocation3], 128
    $region29: #{shadow_top_forward.1} parent=1 // pred_fallthru
      _
    %226 = vsyncpa [#allocation3], 1

</llo_original>
